<compile_context>
chip_gen: v5e
topology: v5e:2x2
jax: 0.10.0
libtpu: 0.0.40
codegen_flags: <defaults>
</compile_context>

<pallas_src>
import jax
import jax.numpy as jnp
from jax.experimental import pallas as pl
from jax.experimental.pallas import tpu as pltpu

# ImageNet normalization constants (same values the PyTorch module uses).
CNN_NORMALIZATION_MEAN = jnp.array([0.485, 0.456, 0.406], dtype=jnp.float32)
CNN_NORMALIZATION_STD = jnp.array([0.229, 0.224, 0.225], dtype=jnp.float32)

_SINGLE_BLOCK_BYTES = 2 << 20   # arrays up to 2 MiB run as one full block
_BLOCK_BUDGET_BYTES = 4 << 20   # target payload per (R, T) block
_VMEM_LIMIT_BYTES = 48 << 20    # 4 MiB x 4 double-buffers + slack; < v7x 64 MiB


def _normalization_kernel(sb_ref, x_ref, o_ref):
    # sb_ref: (R, 2) f32 per-row constants, col 0 = scale (=1/std), col 1 = bias
    # x_ref / o_ref: (R, T) lane-dense tiles of the flattened image
    scale = sb_ref[:, 0:1]
    bias = sb_ref[:, 1:2]
    x = x_ref[...].astype(jnp.float32)
    o_ref[...] = (x * scale + bias).astype(o_ref.dtype)


def _choose_tiles(rows, cols, itemsize):
    """Byte-budget block chooser. Returns (R, T) for a (rows, cols) array."""
    # Native sublane packing: 8 for 32-bit, 16 for bf16/fp16, 32 for int8.
    sub = max(8, 32 // itemsize)
    total_bytes = rows * cols * itemsize

    # Tiny arrays: one full-array block -> one grid step, zero per-step overhead.
    if total_bytes <= _SINGLE_BLOCK_BYTES:
        return rows, cols

    # Row tile: full rows when small (full extent is always a legal block dim),
    # otherwise 256 (a multiple of every supported sublane packing).
    R = rows if rows <= 256 else 256

    # Column tile: multiple of 128 sized so R*T*itemsize ~= budget.  No hard
    # 2048 cap: small-row inputs widen T instead (the only lever left).
    T = (_BLOCK_BUDGET_BYTES // (R * itemsize)) // 128 * 128
    T = max(T, 128)
    if T >= cols:
        T = cols  # full extent (always legal)

    # Megacore (v7x, 2 TCs): make sure the parallel grid has >= 2 steps for
    # anything big enough to matter.
    if pl.cdiv(rows, R) * pl.cdiv(cols, T) < 2:
        if cols >= 256:
            T = max(128, (pl.cdiv(cols, 2) // 128) * 128)
        elif rows > sub:
            R = max(sub, (pl.cdiv(rows, 2) // sub) * sub)
    return R, T


@jax.jit
def normalization(img, mean=CNN_NORMALIZATION_MEAN, std=CNN_NORMALIZATION_STD):
    """(img - mean[None,:,None,None]) / std[None,:,None,None] for NCHW img."""
    N, C, H, W = img.shape
    assert mean.shape == (C,) and std.shape == (C,)

    rows, cols = N * C, H * W
    x2d = img.reshape(rows, cols)  # contiguous reshape: free

    # Exact f32 scale/bias so the kernel is a pure FMA (keeps 1e-6 tolerance).
    # TODO(synk): not bit-identical to (x - mean) / std (folded constants + FMA
    # rounding); fine at 1e-6 tolerance for these ImageNet constants.
    scale_c = (1.0 / std).astype(jnp.float32)          # (C,)
    bias_c = (-mean / std).astype(jnp.float32)         # (C,)
    sb = jnp.tile(jnp.stack([scale_c, bias_c], axis=-1), (N, 1))  # (N*C, 2)

    itemsize = jnp.dtype(img.dtype).itemsize
    R, T = _choose_tiles(rows, cols, itemsize)
    grid = (pl.cdiv(rows, R), pl.cdiv(cols, T))

    out2d = pl.pallas_call(
        _normalization_kernel,
        out_shape=jax.ShapeDtypeStruct((rows, cols), img.dtype),
        grid=grid,
        in_specs=[
            pl.BlockSpec((R, 2), lambda i, j: (i, 0)),   # packed scale/bias
            pl.BlockSpec((R, T), lambda i, j: (i, j)),   # image tiles
        ],
        out_specs=pl.BlockSpec((R, T), lambda i, j: (i, j)),
        compiler_params=pltpu.CompilerParams(
            dimension_semantics=("parallel", "parallel"),
            vmem_limit_bytes=_VMEM_LIMIT_BYTES,
        ),
    )(sb, x2d)

    return out2d.reshape(N, C, H, W)


if __name__ == "__main__":
    key = jax.random.PRNGKey(0)
    # Small NCHW input: batch=2, channels=3 (the module hardcodes 3-channel
    # mean/std), spatial 16x16.  This flattens to a single (6, 256) block.
    x = jax.random.uniform(key, (2, 3, 16, 16), dtype=jnp.float32)

    out = normalization(x)
    out = jax.block_until_ready(out)

    # Reference check in plain JAX.
    ref = (x - CNN_NORMALIZATION_MEAN[None, :, None, None]) / CNN_NORMALIZATION_STD[
        None, :, None, None
    ]
    assert out.shape == x.shape and out.dtype == x.dtype
    assert jnp.allclose(out, ref, atol=1e-6, rtol=1e-6)

    print("KERNEL_OK")
</pallas_src>

<mosaic_0001>
module attributes {stable_mosaic.version = 11 : i64} {
  func.func @_normalization_kernel(%arg0: i32, %arg1: i32, %arg2: memref<6x2xf32, #tpu.memory_space<vmem>>, %arg3: memref<6x256xf32, #tpu.memory_space<vmem>>, %arg4: memref<6x256xf32, #tpu.memory_space<vmem>>) attributes {dimension_semantics = [#tpu.dimension_semantics<parallel>, #tpu.dimension_semantics<parallel>], iteration_bounds = array<i64: 1, 1>, scalar_prefetch = 0 : i64, scratch_operands = 0 : i64, tpu.core_type = #tpu.core_type<tc>, window_params = [{transform_indices = @transform_0, window_bounds = array<i64: 6, 2>}, {transform_indices = @transform_1, window_bounds = array<i64: 6, 256>}, {transform_indices = @transform_2, window_bounds = array<i64: 6, 256>}]} {
    %c0 = arith.constant 0 : index
    %c0_0 = arith.constant 0 : index
    %0 = vector.load %arg2[%c0, %c0_0] : memref<6x2xf32, #tpu.memory_space<vmem>>, vector<6x1xf32>
    %c0_1 = arith.constant 0 : index
    %c1 = arith.constant 1 : index
    %1 = vector.load %arg2[%c0_1, %c1] : memref<6x2xf32, #tpu.memory_space<vmem>>, vector<6x1xf32>
    %c0_2 = arith.constant 0 : index
    %c0_3 = arith.constant 0 : index
    %2 = vector.load %arg3[%c0_2, %c0_3] : memref<6x256xf32, #tpu.memory_space<vmem>>, vector<6x256xf32>
    %3 = vector.broadcast %0 : vector<6x1xf32> to vector<6x256xf32>
    %4 = arith.mulf %2, %3 : vector<6x256xf32>
    %5 = vector.broadcast %1 : vector<6x1xf32> to vector<6x256xf32>
    %6 = arith.addf %4, %5 : vector<6x256xf32>
    %c0_4 = arith.constant 0 : index
    %c0_5 = arith.constant 0 : index
    %7 = vector.load %arg4[%c0_4, %c0_5] : memref<6x256xf32, #tpu.memory_space<vmem>>, vector<6x256xf32>
    tpu.vector_store %arg4[%c0_4, %c0_5], %6 {strides = array<i32>} : memref<6x256xf32, #tpu.memory_space<vmem>>, vector<6x256xf32>,
    return
  }
  func.func @transform_0(%arg0: i32, %arg1: i32) -> (i32, i32) {
    %c0_i32 = arith.constant 0 : i32
    %c0_i32_0 = arith.constant 0 : i32
    return %arg0, %c0_i32 : i32, i32
  }
  func.func @transform_1(%arg0: i32, %arg1: i32) -> (i32, i32) {
    %c0_i32 = arith.constant 0 : i32
    return %arg0, %arg1 : i32, i32
  }
  func.func @transform_2(%arg0: i32, %arg1: i32) -> (i32, i32) {
    %c0_i32 = arith.constant 0 : i32
    return %arg0, %arg1 : i32, i32
  }
}

</mosaic_0001>

<llo_original>
// kernel: tile.7
$region0: #{tile.7}
  %s0 = inlined_call_operand.vmem [shape: f32[2,3,2], index: 0, kind: input, shape index: {}]
  %s1 = inlined_call_operand.vmem [shape: f32[6,2], index: 1, kind: output, shape index: {}]
  $region1: #{tile.7} parent=0
    #allocation0 [shape = 'u8[4096]{0}', space=vmem, size = 0x1000, scoped, tag = 'scoped mem for output reshape']
    #allocation1 [shape = 'u8[8192]{0}', space=vmem, size = 0x2000, scoped, tag = 'scoped mem for input reshape']
    %s3 = ssub.s32 4, 1
    %s4 = scalar_lea.vmem %s0, 2
    %v5 = vld [vmem:[%s4] sm:%s3]
    %s6 = scalar_lea.vmem [#allocation1], 8
    %7 = vst [vmem:[%s6] sm:%s3] %v5
    %v8 = vld [vmem:[%s0] sm:%s3]
    %9 = vst [vmem:[#allocation1] sm:%s3] %v8
    %s10 = smov 3
    %v11 = vld [vmem:[#allocation1] ss:$8 sm:%s10]
    %vm12 = vcmask 23552
    %13 = vst.msk [vmem:[#allocation0] sm:$0x3] %vm12, %v11
    %s14 = scalar_lea.vmem [#allocation1], 1
    %s15 = smov 3
    %v16 = vld [vmem:[%s14] ss:$8 sm:%s15]
    %17 = vrot.lane.b32.xlu0 %v16, 3
    %v18 = vpop.permute.xlu0 %17
    %vm19 = vcmask 48152
    %20 = vst.msk [vmem:[#allocation0] sm:$0x3] %vm19, %v18
    %s22 = ssub.s32 4, 1
    %v23 = vld [vmem:[#allocation0] sm:%s22]
    %s25 = ssub.s32 4, 1
    %26 = vst [vmem:[%s1] sm:%s25] %v23

// kernel: normalization.1
$region0: #{normalization.1}
  #allocation0 [shape = 'u32[]', space=smem, size = 0x4, offset = 0x4, fixed_abs, tag = 'smem constant byte address 0x4 - core index']
  #allocation1 [shape = 'u32[72,128]{1,0:T(1,128)}', space=vmem, size = 0x9000, scoped, tag = 'internal scratch']
  %s0 = inlined_call_operand.vmem [shape: f32[6,2], index: 0, kind: input, shape index: {}]
  %s1 = inlined_call_operand.vmem [shape: f32[6,256], index: 1, kind: input, shape index: {}]
  %s2 = inlined_call_operand.vmem [shape: f32[6,256], index: 2, kind: output, shape index: {}]
  %s3 = sld [smem:[#allocation0]]
  $region18: #{normalization.1} parent=0
    _
  %s5 = ssub.s32 1, %s3
  %s6 = scalar_select 0, %s5, %s3
  // Predicated region
  $region2: #{normalization.1} parent=0 // pred_check
    _
  $region3: #{normalization.1} parent=0 // pred_check_branch
    %8 = sbr.rel (0) target = $region5
  $region4: #{normalization.1} parent=0 // pred_region
    _
  $region5: #{normalization.1} parent=0 // pred_fallthru
    _
  // Predicated region
  $region6: #{normalization.1} parent=0 // pred_check
    _
  $region7: #{normalization.1} parent=0 // pred_check_branch
    %10 = sbr.rel (0) target = $region9
  $region8: #{normalization.1} parent=0 // pred_region
    _
  $region9: #{normalization.1} parent=0 // pred_fallthru
    _
  %v11 = vld [vmem:[%s0] sm:$0x3f]
  %v12 = vld [vmem:[%s1] sm:$0x3f]
  %v13 = vld [vmem:[%s1 + $0x8] sm:$0x3f]
  %15 = vset.pattern.permute.xlu0 0
  %16 = vperm.xlu0 %15, %v11
  %v17 = vpop.permute.xlu0 %16
  %v19 = vmul.f32 %v12, %v17
  %v20 = vmul.f32 %v13, %v17
  %21 = vset.pattern.permute.xlu0 1
  %22 = vperm.xlu0 %21, %v11
  %v23 = vpop.permute.xlu0 %22
  %v25 = vadd.f32 %v19, %v23
  %v26 = vadd.f32 %v20, %v23
  %27 = vst [vmem:[%s2] sm:$0x3f] %v25
  %28 = vst [vmem:[%s2 + $0x8] sm:$0x3f] %v26
  // Predicated region
  $region10: #{normalization.1} parent=0 // pred_check
    _
  $region11: #{normalization.1} parent=0 // pred_check_branch
    %30 = sbr.rel (0) target = $region13
  $region12: #{normalization.1} parent=0 // pred_region
    _
  $region13: #{normalization.1} parent=0 // pred_fallthru
    _
  // Predicated region
  $region14: #{normalization.1} parent=0 // pred_check
    _
  $region15: #{normalization.1} parent=0 // pred_check_branch
    %32 = sbr.rel (0) target = $region17
  $region16: #{normalization.1} parent=0 // pred_region
    _
  $region17: #{normalization.1} parent=0 // pred_fallthru
    _

</llo_original>
